<compile_context>
chip_gen: v7x
topology: tpu7x:2x2x1
jax: 0.10.0
libtpu: 0.0.40
codegen_flags: <defaults>
</compile_context>

<pallas_src>
from functools import partial

import jax
import jax.numpy as jnp
from jax import lax
from jax.experimental import pallas as pl
from jax.experimental.pallas import tpu as pltpu


def _asp_kernel(mask_ref, x_ref, wt_ref, b_ref, attn_ref, out_ref,
                m_sc, l_sc, s1_sc, s2_sc, *, t_total, guard_ragged_t):
    # mask_ref : (BB, TT)    f32  -- 1.0 for valid frames
    # x_ref    : (BB, TT, D) f32
    # wt_ref   : (D, D)      f32/bf16 -- sap_linear.weight transposed (in, out)
    # b_ref    : (1, D)      f32
    # attn_ref : (1, D)      f32  -- attention vector as a row
    # out_ref  : (BB, 2*D)   f32  -- [mu || rh], written once per batch block
    # scratch  : m (BB,1), l (BB,1), s1 (BB,D), s2 (BB,D)  -- online softmax state
    BB, TT, D = x_ref.shape
    t = pl.program_id(1)
    nt = pl.num_programs(1)

    @pl.when(t == 0)
    def _():
        m_sc[...] = jnp.full_like(m_sc, -jnp.inf)
        l_sc[...] = jnp.zeros_like(l_sc)
        s1_sc[...] = jnp.zeros_like(s1_sc)
        s2_sc[...] = jnp.zeros_like(s2_sc)

    x3 = x_ref[...]                                     # (BB, TT, D)
    valid = mask_ref[...] > 0.0                         # (BB, TT)
    if guard_ragged_t:
        # Last T block is partial: out-of-bounds frames hold garbage (possibly NaN bits).
        # Exclude them from the softmax AND zero x so 0*NaN cannot reach valid rows.
        frame = lax.broadcasted_iota(jnp.int32, (BB, TT), 1) + t * TT
        valid = jnp.logical_and(valid, frame < t_total)
        x3 = jnp.where(valid[:, :, None], x3, jnp.float32(0.0))

    # h = tanh(x @ W^T + b): one (BB*TT, D) @ (D, D) MXU matmul per grid step.
    x2 = x3.reshape(BB * TT, D)
    h = jnp.tanh(
        jnp.dot(x2.astype(wt_ref.dtype), wt_ref[...],
                preferred_element_type=jnp.float32) + b_ref[...])

    # Attention logits: VPU multiply + lane reduction (avoid an N=1 MXU matvec).
    s = jnp.sum(h.reshape(BB, TT, D) * attn_ref[...], axis=-1)       # (BB, TT)
    s = jnp.where(valid, s, jnp.float32(-1e30))

    # Online (streaming) masked softmax statistics over the time axis.
    m_prev = m_sc[...]                                                # (BB, 1)
    m_new = jnp.maximum(m_prev, jnp.max(s, axis=-1, keepdims=True))
    alpha = jnp.exp(m_prev - m_new)                                   # (BB, 1)
    p = jnp.where(valid, jnp.exp(s - m_new), jnp.float32(0.0))        # (BB, TT)

    l_sc[...] = alpha * l_sc[...] + jnp.sum(p, axis=-1, keepdims=True)

    # Weighted 1st/2nd moments on VPU + XLU (sublane reduce over T); the MXU stays
    # dedicated to the tanh-linear, and no (BB,TT,D) x*x einsum operand is needed.
    wx = p[:, :, None] * x3                                           # (BB, TT, D)
    s1_sc[...] = alpha * s1_sc[...] + jnp.sum(wx, axis=1)
    s2_sc[...] = alpha * s2_sc[...] + jnp.sum(wx * x3, axis=1)
    m_sc[...] = m_new

    @pl.when(t == nt - 1)
    def _():
        l = jnp.maximum(l_sc[...], jnp.float32(1e-30))    # guard fully-masked rows
        mu = s1_sc[...] / l
        ex2 = s2_sc[...] / l
        out_ref[:, :D] = mu
        # NOTE: ex2 - mu*mu matches the PyTorch reference formula (clamped at 1e-5).
        out_ref[:, D:] = jnp.sqrt(jnp.maximum(ex2 - mu * mu, jnp.float32(1e-5)))


def _vmem_capacity_bytes():
    """Physical VMEM per TensorCore; conservative fallback = v7x (64 MiB)."""
    try:
        cap = int(pltpu.get_tpu_info().vmem_capacity_bytes)
    except Exception:
        cap = 64 * 1024 * 1024
    return max(64 * 1024 * 1024, min(cap, 128 * 1024 * 1024))


def _pick_blocks(B, T, D):
    """Choose (rows/block BB, frames/block TT, vmem_limit_bytes).

    Working-set model per grid step (f32):
      per row, per frame : 2x double-buffered xs + h + w*x + w*x*x temps  ~= (5*D + 8) * 4 bytes
      per row, fixed     : out block (2 bufs, 2D wide) + moment scratch   ~= (6*D + 4) * 4 bytes
      grid-invariant     : W^T (conservatively counted double-buffered)   =  2*D*D*4 + small
    Budget ~= physical_VMEM / 2; vmem_limit_bytes ~= 3/4 of physical VMEM.
    """
    f32 = 4
    cap = _vmem_capacity_bytes()
    vmem_limit = (cap * 3) // 4
    budget = cap // 2

    const_bytes = (2 * D * D + 4 * D) * f32
    per_row_per_t = (5 * D + 8) * f32
    per_row_fixed = (6 * D + 4) * f32
    avail = max(budget - const_bytes, 1)

    def max_rows(tt):
        return avail // (per_row_per_t * tt + per_row_fixed)

    bb_min = B if B < 8 else 8

    # Prefer no T tiling; otherwise stream TT frames at a time (TT multiple of 128,
    # as required by the (BB, TT) mask block's lane dimension).
    if T <= 128 or max_rows(T) >= bb_min:
        TT = T
    else:
        tt_cap = (avail // bb_min - per_row_fixed) // per_row_per_t
        TT = max(128, (tt_cap // 128) * 128)
        TT = min(TT, max(128, (T // 128) * 128))
        # TODO(synk): if even (BB=8, TT=128) overflows the budget (very large D), tile D too.

    if B <= 8:
        BB = B                                   # full-batch block (== full B dim, legal)
    else:
        bb = min(max_rows(TT), 512)              # no perf benefit beyond a few MiB of xs
        bb = max(8, (bb // 8) * 8)
        half = -(-B // 2)                        # keep >= 2 batch blocks so both v7x
        half8 = -(-half // 8) * 8                # TensorCores get work (no-op on v5e/v6e)
        bb = min(bb, max(8, half8))
        BB = min(bb, -(-B // 8) * 8)
    return int(BB), int(TT), int(vmem_limit)


def attentive_statistics_pooling(xs, mask, weight, bias, attention, *, use_bf16_matmul=False):
    """xs: (B, T, D) f32, mask: (B, T) prefix-valid -> (B, 2*D) f32."""
    B, T, D = xs.shape
    BB, TT, vmem_limit = _pick_blocks(B, T, D)
    nb = -(-B // BB)
    nt = -(-T // TT)

    # PyTorch Linear stores (out, in); we compute x @ W.T, so pass W transposed.
    wt = weight.T.astype(jnp.bfloat16 if use_bf16_matmul else jnp.float32)
    b2 = bias.reshape(1, D).astype(jnp.float32)
    attn_row = attention.reshape(1, D).astype(jnp.float32)
    mask_f = mask.astype(jnp.float32)

    kernel = partial(_asp_kernel, t_total=T, guard_ragged_t=(T % TT != 0))

    def build(single_buffer_consts):
        # Grid-invariant operands don't need double buffering; reclaim their VMEM.
        const_kw = {"pipeline_mode": pl.Buffered(1)} if single_buffer_consts else {}
        grid_spec = pltpu.PrefetchScalarGridSpec(
            num_scalar_prefetch=0,
            grid=(nb, nt),
            in_specs=[
                pl.BlockSpec((BB, TT), lambda b, t: (b, t)),              # mask
                pl.BlockSpec((BB, TT, D), lambda b, t: (b, t, 0)),        # xs (streamed)
                pl.BlockSpec((D, D), lambda b, t: (0, 0), **const_kw),    # W^T (resident)
                pl.BlockSpec((1, D), lambda b, t: (0, 0), **const_kw),    # bias
                pl.BlockSpec((1, D), lambda b, t: (0, 0), **const_kw),    # attention row
            ],
            out_specs=pl.BlockSpec((BB, 2 * D), lambda b, t: (b, 0)),     # [mu || rh]
            scratch_shapes=[
                pltpu.VMEM((BB, 1), jnp.float32),    # running max m
                pltpu.VMEM((BB, 1), jnp.float32),    # running denom l
                pltpu.VMEM((BB, D), jnp.float32),    # running sum(p * x)
                pltpu.VMEM((BB, D), jnp.float32),    # running sum(p * x^2)
            ],
        )
        return pl.pallas_call(
            kernel,
            out_shape=jax.ShapeDtypeStruct((B, 2 * D), jnp.float32),
            grid_spec=grid_spec,
            compiler_params=pltpu.CompilerParams(
                dimension_semantics=("parallel", "arbitrary"),
                vmem_limit_bytes=vmem_limit,
            ),
        )

    try:
        out = build(True)(mask_f, xs, wt, b2, attn_row)
    except Exception:
        # pipeline_mode / Buffered(1) not supported on this JAX build: default double buffering.
        out = build(False)(mask_f, xs, wt, b2, attn_row)
    return out


def _reference(xs, mask, weight, bias, attention):
    """Pure-numpy reference mirroring the PyTorch per-sample loop."""
    import numpy as np
    xs_n = np.asarray(xs)
    feat_lens = np.asarray(mask).sum(axis=1).astype(int)
    outs = []
    for x, L in zip(xs_n, feat_lens):
        xl = x[:L]                                       # (L, D)
        h = np.tanh(xl @ np.asarray(weight).T + np.asarray(bias))
        s = (h @ np.asarray(attention)).squeeze(-1)      # (L,)
        s = s - s.max()
        w = np.exp(s) / np.exp(s).sum()
        w = w[:, None]
        mu = (xl * w).sum(axis=0)
        rh = np.sqrt(np.maximum((xl ** 2 * w).sum(axis=0) - mu ** 2, 1e-5))
        outs.append(np.concatenate([mu, rh]))
    return np.stack(outs)


if __name__ == "__main__":
    import numpy as np

    B, T, D = 2, 16, 32
    key = jax.random.PRNGKey(0)
    k_x, k_w, k_b, k_a = jax.random.split(key, 4)

    xs = jax.random.normal(k_x, (B, T, D), dtype=jnp.float32)

    # Deterministic parameter init (shapes from nn.Linear(D, D) and attention (D, 1)).
    weight = jax.random.normal(k_w, (D, D), dtype=jnp.float32) * 0.1   # (out, in)
    bias = jax.random.normal(k_b, (D,), dtype=jnp.float32) * 0.1
    attention = jax.random.normal(k_a, (D, 1), dtype=jnp.float32)      # N(0, 1)

    # Prefix-valid mask (variable lengths), matching the PyTorch x[:feat_len] slicing.
    feat_lens = np.array([T, T - 6], dtype=np.int32)
    mask = (np.arange(T)[None, :] < feat_lens[:, None]).astype(np.float32)
    mask = jnp.asarray(mask)

    out = attentive_statistics_pooling(xs, mask, weight, bias, attention)
    out = jax.block_until_ready(out)

    ref = _reference(xs, mask, weight, bias, attention)
    np.testing.assert_allclose(np.asarray(out), ref, rtol=1e-4, atol=1e-4)

    print("KERNEL_OK")
</pallas_src>

<mosaic_0001>
module attributes {stable_mosaic.version = 11 : i64} {
  func.func @_asp_kernel(%arg0: i32, %arg1: i32, %arg2: memref<2x16xf32, #tpu.memory_space<vmem>>, %arg3: memref<2x16x32xf32, #tpu.memory_space<vmem>>, %arg4: memref<32x32xf32, #tpu.memory_space<vmem>>, %arg5: memref<1x32xf32, #tpu.memory_space<vmem>>, %arg6: memref<1x32xf32, #tpu.memory_space<vmem>>, %arg7: memref<2x64xf32, #tpu.memory_space<vmem>>, %arg8: memref<2x1xf32, #tpu.memory_space<vmem>>, %arg9: memref<2x1xf32, #tpu.memory_space<vmem>>, %arg10: memref<2x32xf32, #tpu.memory_space<vmem>>, %arg11: memref<2x32xf32, #tpu.memory_space<vmem>>) attributes {dimension_semantics = [#tpu.dimension_semantics<parallel>, #tpu.dimension_semantics<arbitrary>], iteration_bounds = array<i64: 1, 1>, scalar_prefetch = 0 : i64, scratch_operands = 4 : i64, tpu.core_type = #tpu.core_type<tc>, window_params = [{transform_indices = @transform_0, window_bounds = array<i64: 2, 16>}, {transform_indices = @transform_1, window_bounds = array<i64: 2, 16, 32>}, {pipeline_mode = #tpu.pipeline_mode<synchronous>, transform_indices = @transform_2, window_bounds = array<i64: 32, 32>}, {pipeline_mode = #tpu.pipeline_mode<synchronous>, transform_indices = @transform_3, window_bounds = array<i64: 1, 32>}, {pipeline_mode = #tpu.pipeline_mode<synchronous>, transform_indices = @transform_4, window_bounds = array<i64: 1, 32>}, {transform_indices = @transform_5, window_bounds = array<i64: 2, 64>}]} {
    %c0_i32 = arith.constant 0 : i32
    %0 = arith.cmpi eq, %arg1, %c0_i32 : i32
    %1 = arith.extui %0 : i1 to i32
    %c0_i32_0 = arith.constant 0 : i32
    %2 = arith.cmpi ne, %1, %c0_i32_0 : i32
    scf.if %2 {
      %cst_37 = arith.constant 0xFF800000 : f32
      %59 = vector.broadcast %cst_37 : f32 to vector<2x1xf32>
      %c0_38 = arith.constant 0 : index
      %c0_39 = arith.constant 0 : index
      %60 = vector.load %arg8[%c0_38, %c0_39] : memref<2x1xf32, #tpu.memory_space<vmem>>, vector<2x1xf32>
      tpu.vector_store %arg8[%c0_38, %c0_39], %59 {strides = array<i32>} : memref<2x1xf32, #tpu.memory_space<vmem>>, vector<2x1xf32>,
      %cst_40 = arith.constant 0.000000e+00 : f32
      %61 = vector.broadcast %cst_40 : f32 to vector<2x1xf32>
      %c0_41 = arith.constant 0 : index
      %c0_42 = arith.constant 0 : index
      %62 = vector.load %arg9[%c0_41, %c0_42] : memref<2x1xf32, #tpu.memory_space<vmem>>, vector<2x1xf32>
      tpu.vector_store %arg9[%c0_41, %c0_42], %61 {strides = array<i32>} : memref<2x1xf32, #tpu.memory_space<vmem>>, vector<2x1xf32>,
      %cst_43 = arith.constant 0.000000e+00 : f32
      %63 = vector.broadcast %cst_43 : f32 to vector<2x32xf32>
      %c0_44 = arith.constant 0 : index
      %c0_45 = arith.constant 0 : index
      %64 = vector.load %arg10[%c0_44, %c0_45] : memref<2x32xf32, #tpu.memory_space<vmem>>, vector<2x32xf32>
      tpu.vector_store %arg10[%c0_44, %c0_45], %63 {strides = array<i32>} : memref<2x32xf32, #tpu.memory_space<vmem>>, vector<2x32xf32>,
      %cst_46 = arith.constant 0.000000e+00 : f32
      %65 = vector.broadcast %cst_46 : f32 to vector<2x32xf32>
      %c0_47 = arith.constant 0 : index
      %c0_48 = arith.constant 0 : index
      %66 = vector.load %arg11[%c0_47, %c0_48] : memref<2x32xf32, #tpu.memory_space<vmem>>, vector<2x32xf32>
      tpu.vector_store %arg11[%c0_47, %c0_48], %65 {strides = array<i32>} : memref<2x32xf32, #tpu.memory_space<vmem>>, vector<2x32xf32>,
    } else {
    }
    %c0 = arith.constant 0 : index
    %c0_1 = arith.constant 0 : index
    %c0_2 = arith.constant 0 : index
    %3 = vector.load %arg3[%c0, %c0_1, %c0_2] : memref<2x16x32xf32, #tpu.memory_space<vmem>>, vector<2x16x32xf32>
    %c0_3 = arith.constant 0 : index
    %c0_4 = arith.constant 0 : index
    %4 = vector.load %arg2[%c0_3, %c0_4] : memref<2x16xf32, #tpu.memory_space<vmem>>, vector<2x16xf32>
    %cst = arith.constant 0.000000e+00 : f32
    %5 = vector.broadcast %cst : f32 to vector<2x16xf32>
    %6 = arith.cmpf ogt, %4, %5 : vector<2x16xf32>
    %7 = vector.shape_cast %3 : vector<2x16x32xf32> to vector<32x32xf32>
    %c0_5 = arith.constant 0 : index
    %c0_6 = arith.constant 0 : index
    %8 = vector.load %arg4[%c0_5, %c0_6] : memref<32x32xf32, #tpu.memory_space<vmem>>, vector<32x32xf32>
    %cst_7 = arith.constant dense<0.000000e+00> : vector<32x32xf32>
    %9 = tpu.matmul %7, %8, %cst_7 {dimension_numbers = #tpu.dot_dimension_numbers<[1], [0], [0], [1], [0, 0, 1, 1], [], []>} : vector<32x32xf32>, vector<32x32xf32>, vector<32x32xf32> -> vector<32x32xf32>
    %c0_8 = arith.constant 0 : index
    %c0_9 = arith.constant 0 : index
    %10 = vector.load %arg5[%c0_8, %c0_9] : memref<1x32xf32, #tpu.memory_space<vmem>>, vector<1x32xf32>
    %11 = vector.broadcast %10 : vector<1x32xf32> to vector<32x32xf32>
    %12 = arith.addf %9, %11 : vector<32x32xf32>
    %13 = math.tanh %12 : vector<32x32xf32>
    %14 = vector.shape_cast %13 : vector<32x32xf32> to vector<2x16x32xf32>
    %c0_10 = arith.constant 0 : index
    %c0_11 = arith.constant 0 : index
    %15 = vector.load %arg6[%c0_10, %c0_11] : memref<1x32xf32, #tpu.memory_space<vmem>>, vector<1x32xf32>
    %16 = vector.shape_cast %15 : vector<1x32xf32> to vector<1x1x32xf32>
    %17 = vector.broadcast %16 : vector<1x1x32xf32> to vector<2x16x32xf32>
    %18 = arith.mulf %14, %17 : vector<2x16x32xf32>
    %cst_12 = arith.constant dense<0.000000e+00> : vector<2x16xf32>
    %19 = vector.multi_reduction <add>, %18, %cst_12 [2] : vector<2x16x32xf32> to vector<2x16xf32>
    %cst_13 = arith.constant -1.000000e+30 : f32
    %20 = vector.broadcast %cst_13 : f32 to vector<2x16xf32>
    %21 = arith.select %6, %19, %20 : vector<2x16xi1>, vector<2x16xf32>
    %c0_14 = arith.constant 0 : index
    %c0_15 = arith.constant 0 : index
    %22 = vector.load %arg8[%c0_14, %c0_15] : memref<2x1xf32, #tpu.memory_space<vmem>>, vector<2x1xf32>
    %cst_16 = arith.constant dense<0xFF800000> : vector<2xf32>
    %23 = vector.multi_reduction <maximumf>, %21, %cst_16 [1] : vector<2x16xf32> to vector<2xf32>
    %24 = vector.shape_cast %23 : vector<2xf32> to vector<2x1xf32>
    %25 = arith.maximumf %22, %24 : vector<2x1xf32>
    %26 = arith.subf %22, %25 : vector<2x1xf32>
    %27 = math.exp %26 : vector<2x1xf32>
    %28 = vector.broadcast %25 : vector<2x1xf32> to vector<2x16xf32>
    %29 = arith.subf %21, %28 : vector<2x16xf32>
    %30 = math.exp %29 : vector<2x16xf32>
    %cst_17 = arith.constant 0.000000e+00 : f32
    %31 = vector.broadcast %cst_17 : f32 to vector<2x16xf32>
    %32 = arith.select %6, %30, %31 : vector<2x16xi1>, vector<2x16xf32>
    %c0_18 = arith.constant 0 : index
    %c0_19 = arith.constant 0 : index
    %33 = vector.load %arg9[%c0_18, %c0_19] : memref<2x1xf32, #tpu.memory_space<vmem>>, vector<2x1xf32>
    %34 = arith.mulf %27, %33 : vector<2x1xf32>
    %cst_20 = arith.constant dense<0.000000e+00> : vector<2xf32>
    %35 = vector.multi_reduction <add>, %32, %cst_20 [1] : vector<2x16xf32> to vector<2xf32>
    %36 = vector.shape_cast %35 : vector<2xf32> to vector<2x1xf32>
    %37 = arith.addf %34, %36 : vector<2x1xf32>
    %c0_21 = arith.constant 0 : index
    %c0_22 = arith.constant 0 : index
    %38 = vector.load %arg9[%c0_21, %c0_22] : memref<2x1xf32, #tpu.memory_space<vmem>>, vector<2x1xf32>
    tpu.vector_store %arg9[%c0_21, %c0_22], %37 {strides = array<i32>} : memref<2x1xf32, #tpu.memory_space<vmem>>, vector<2x1xf32>,
    %39 = vector.shape_cast %32 : vector<2x16xf32> to vector<2x16x1xf32>
    %40 = vector.broadcast %39 : vector<2x16x1xf32> to vector<2x16x32xf32>
    %41 = arith.mulf %40, %3 : vector<2x16x32xf32>
    %c0_23 = arith.constant 0 : index
    %c0_24 = arith.constant 0 : index
    %42 = vector.load %arg10[%c0_23, %c0_24] : memref<2x32xf32, #tpu.memory_space<vmem>>, vector<2x32xf32>
    %43 = vector.broadcast %27 : vector<2x1xf32> to vector<2x32xf32>
    %44 = arith.mulf %43, %42 : vector<2x32xf32>
    %cst_25 = arith.constant dense<0.000000e+00> : vector<2x32xf32>
    %45 = vector.multi_reduction <add>, %41, %cst_25 [1] : vector<2x16x32xf32> to vector<2x32xf32>
    %46 = arith.addf %44, %45 : vector<2x32xf32>
    %c0_26 = arith.constant 0 : index
    %c0_27 = arith.constant 0 : index
    %47 = vector.load %arg10[%c0_26, %c0_27] : memref<2x32xf32, #tpu.memory_space<vmem>>, vector<2x32xf32>
    tpu.vector_store %arg10[%c0_26, %c0_27], %46 {strides = array<i32>} : memref<2x32xf32, #tpu.memory_space<vmem>>, vector<2x32xf32>,
    %c0_28 = arith.constant 0 : index
    %c0_29 = arith.constant 0 : index
    %48 = vector.load %arg11[%c0_28, %c0_29] : memref<2x32xf32, #tpu.memory_space<vmem>>, vector<2x32xf32>
    %49 = vector.broadcast %27 : vector<2x1xf32> to vector<2x32xf32>
    %50 = arith.mulf %49, %48 : vector<2x32xf32>
    %51 = arith.mulf %41, %3 : vector<2x16x32xf32>
    %cst_30 = arith.constant dense<0.000000e+00> : vector<2x32xf32>
    %52 = vector.multi_reduction <add>, %51, %cst_30 [1] : vector<2x16x32xf32> to vector<2x32xf32>
    %53 = arith.addf %50, %52 : vector<2x32xf32>
    %c0_31 = arith.constant 0 : index
    %c0_32 = arith.constant 0 : index
    %54 = vector.load %arg11[%c0_31, %c0_32] : memref<2x32xf32, #tpu.memory_space<vmem>>, vector<2x32xf32>
    tpu.vector_store %arg11[%c0_31, %c0_32], %53 {strides = array<i32>} : memref<2x32xf32, #tpu.memory_space<vmem>>, vector<2x32xf32>,
    %c0_33 = arith.constant 0 : index
    %c0_34 = arith.constant 0 : index
    %55 = vector.load %arg8[%c0_33, %c0_34] : memref<2x1xf32, #tpu.memory_space<vmem>>, vector<2x1xf32>
    tpu.vector_store %arg8[%c0_33, %c0_34], %25 {strides = array<i32>} : memref<2x1xf32, #tpu.memory_space<vmem>>, vector<2x1xf32>,
    %c0_i32_35 = arith.constant 0 : i32
    %56 = arith.cmpi eq, %arg1, %c0_i32_35 : i32
    %57 = arith.extui %56 : i1 to i32
    %c0_i32_36 = arith.constant 0 : i32
    %58 = arith.cmpi ne, %57, %c0_i32_36 : i32
    scf.if %58 {
      %c0_37 = arith.constant 0 : index
      %c0_38 = arith.constant 0 : index
      %59 = vector.load %arg9[%c0_37, %c0_38] : memref<2x1xf32, #tpu.memory_space<vmem>>, vector<2x1xf32>
      %cst_39 = arith.constant 1.000000e-30 : f32
      %60 = vector.broadcast %cst_39 : f32 to vector<2x1xf32>
      %61 = arith.maximumf %59, %60 : vector<2x1xf32>
      %c0_40 = arith.constant 0 : index
      %c0_41 = arith.constant 0 : index
      %62 = vector.load %arg10[%c0_40, %c0_41] : memref<2x32xf32, #tpu.memory_space<vmem>>, vector<2x32xf32>
      %63 = vector.broadcast %61 : vector<2x1xf32> to vector<2x32xf32>
      %64 = arith.divf %62, %63 : vector<2x32xf32>
      %c0_42 = arith.constant 0 : index
      %c0_43 = arith.constant 0 : index
      %65 = vector.load %arg11[%c0_42, %c0_43] : memref<2x32xf32, #tpu.memory_space<vmem>>, vector<2x32xf32>
      %66 = vector.broadcast %61 : vector<2x1xf32> to vector<2x32xf32>
      %67 = arith.divf %65, %66 : vector<2x32xf32>
      %c0_44 = arith.constant 0 : index
      %c0_45 = arith.constant 0 : index
      %68 = vector.load %arg7[%c0_44, %c0_45] : memref<2x64xf32, #tpu.memory_space<vmem>>, vector<2x32xf32>
      tpu.vector_store %arg7[%c0_44, %c0_45], %64 {strides = array<i32>} : memref<2x64xf32, #tpu.memory_space<vmem>>, vector<2x32xf32>,
      %69 = arith.mulf %64, %64 : vector<2x32xf32>
      %70 = arith.subf %67, %69 : vector<2x32xf32>
      %cst_46 = arith.constant 9.99999974E-6 : f32
      %71 = vector.broadcast %cst_46 : f32 to vector<2x32xf32>
      %72 = arith.maximumf %70, %71 : vector<2x32xf32>
      %73 = math.sqrt %72 : vector<2x32xf32>
      %c0_47 = arith.constant 0 : index
      %c32 = arith.constant 32 : index
      %74 = vector.load %arg7[%c0_47, %c32] : memref<2x64xf32, #tpu.memory_space<vmem>>, vector<2x32xf32>
      tpu.vector_store %arg7[%c0_47, %c32], %73 {strides = array<i32>} : memref<2x64xf32, #tpu.memory_space<vmem>>, vector<2x32xf32>,
    } else {
    }
    return
  }
  func.func @transform_0(%arg0: i32, %arg1: i32) -> (i32, i32) {
    %c0_i32 = arith.constant 0 : i32
    return %arg0, %arg1 : i32, i32
  }
  func.func @transform_1(%arg0: i32, %arg1: i32) -> (i32, i32, i32) {
    %c0_i32 = arith.constant 0 : i32
    %c0_i32_0 = arith.constant 0 : i32
    return %arg0, %arg1, %c0_i32 : i32, i32, i32
  }
  func.func @transform_2(%arg0: i32, %arg1: i32) -> (i32, i32) {
    %c0_i32 = arith.constant 0 : i32
    %c0_i32_0 = arith.constant 0 : i32
    %c0_i32_1 = arith.constant 0 : i32
    return %c0_i32, %c0_i32_0 : i32, i32
  }
  func.func @transform_3(%arg0: i32, %arg1: i32) -> (i32, i32) {
    %c0_i32 = arith.constant 0 : i32
    %c0_i32_0 = arith.constant 0 : i32
    %c0_i32_1 = arith.constant 0 : i32
    return %c0_i32, %c0_i32_0 : i32, i32
  }
  func.func @transform_4(%arg0: i32, %arg1: i32) -> (i32, i32) {
    %c0_i32 = arith.constant 0 : i32
    %c0_i32_0 = arith.constant 0 : i32
    %c0_i32_1 = arith.constant 0 : i32
    return %c0_i32, %c0_i32_0 : i32, i32
  }
  func.func @transform_5(%arg0: i32, %arg1: i32) -> (i32, i32) {
    %c0_i32 = arith.constant 0 : i32
    %c0_i32_0 = arith.constant 0 : i32
    return %arg0, %c0_i32 : i32, i32
  }
}

module attributes {stable_mosaic.version = 11 : i64} {
  func.func @_asp_kernel(%arg0: i32, %arg1: i32, %arg2: memref<2x16xf32, #tpu.memory_space<vmem>>, %arg3: memref<2x16x32xf32, #tpu.memory_space<vmem>>, %arg4: memref<32x32xf32, #tpu.memory_space<vmem>>, %arg5: memref<1x32xf32, #tpu.memory_space<vmem>>, %arg6: memref<1x32xf32, #tpu.memory_space<vmem>>, %arg7: memref<2x64xf32, #tpu.memory_space<vmem>>, %arg8: memref<2x1xf32, #tpu.memory_space<vmem>>, %arg9: memref<2x1xf32, #tpu.memory_space<vmem>>, %arg10: memref<2x32xf32, #tpu.memory_space<vmem>>, %arg11: memref<2x32xf32, #tpu.memory_space<vmem>>) attributes {dimension_semantics = [#tpu.dimension_semantics<parallel>, #tpu.dimension_semantics<arbitrary>], iteration_bounds = array<i64: 1, 1>, scalar_prefetch = 0 : i64, scratch_operands = 4 : i64, tpu.core_type = #tpu.core_type<tc>, window_params = [{transform_indices = @transform_0, window_bounds = array<i64: 2, 16>}, {transform_indices = @transform_1, window_bounds = array<i64: 2, 16, 32>}, {pipeline_mode = #tpu.pipeline_mode<synchronous>, transform_indices = @transform_2, window_bounds = array<i64: 32, 32>}, {pipeline_mode = #tpu.pipeline_mode<synchronous>, transform_indices = @transform_3, window_bounds = array<i64: 1, 32>}, {pipeline_mode = #tpu.pipeline_mode<synchronous>, transform_indices = @transform_4, window_bounds = array<i64: 1, 32>}, {transform_indices = @transform_5, window_bounds = array<i64: 2, 64>}]} {
    %c0_i32 = arith.constant 0 : i32
    %0 = arith.cmpi eq, %arg1, %c0_i32 : i32
    %1 = arith.extui %0 : i1 to i32
    %c0_i32_0 = arith.constant 0 : i32
    %2 = arith.cmpi ne, %1, %c0_i32_0 : i32
    scf.if %2 {
      %cst_37 = arith.constant 0xFF800000 : f32
      %59 = vector.broadcast %cst_37 : f32 to vector<2x1xf32>
      %c0_38 = arith.constant 0 : index
      %c0_39 = arith.constant 0 : index
      %60 = vector.load %arg8[%c0_38, %c0_39] : memref<2x1xf32, #tpu.memory_space<vmem>>, vector<2x1xf32>
      tpu.vector_store %arg8[%c0_38, %c0_39], %59 {strides = array<i32>} : memref<2x1xf32, #tpu.memory_space<vmem>>, vector<2x1xf32>,
      %cst_40 = arith.constant 0.000000e+00 : f32
      %61 = vector.broadcast %cst_40 : f32 to vector<2x1xf32>
      %c0_41 = arith.constant 0 : index
      %c0_42 = arith.constant 0 : index
      %62 = vector.load %arg9[%c0_41, %c0_42] : memref<2x1xf32, #tpu.memory_space<vmem>>, vector<2x1xf32>
      tpu.vector_store %arg9[%c0_41, %c0_42], %61 {strides = array<i32>} : memref<2x1xf32, #tpu.memory_space<vmem>>, vector<2x1xf32>,
      %cst_43 = arith.constant 0.000000e+00 : f32
      %63 = vector.broadcast %cst_43 : f32 to vector<2x32xf32>
      %c0_44 = arith.constant 0 : index
      %c0_45 = arith.constant 0 : index
      %64 = vector.load %arg10[%c0_44, %c0_45] : memref<2x32xf32, #tpu.memory_space<vmem>>, vector<2x32xf32>
      tpu.vector_store %arg10[%c0_44, %c0_45], %63 {strides = array<i32>} : memref<2x32xf32, #tpu.memory_space<vmem>>, vector<2x32xf32>,
      %cst_46 = arith.constant 0.000000e+00 : f32
      %65 = vector.broadcast %cst_46 : f32 to vector<2x32xf32>
      %c0_47 = arith.constant 0 : index
      %c0_48 = arith.constant 0 : index
      %66 = vector.load %arg11[%c0_47, %c0_48] : memref<2x32xf32, #tpu.memory_space<vmem>>, vector<2x32xf32>
      tpu.vector_store %arg11[%c0_47, %c0_48], %65 {strides = array<i32>} : memref<2x32xf32, #tpu.memory_space<vmem>>, vector<2x32xf32>,
    } else {
    }
    %c0 = arith.constant 0 : index
    %c0_1 = arith.constant 0 : index
    %c0_2 = arith.constant 0 : index
    %3 = vector.load %arg3[%c0, %c0_1, %c0_2] : memref<2x16x32xf32, #tpu.memory_space<vmem>>, vector<2x16x32xf32>
    %c0_3 = arith.constant 0 : index
    %c0_4 = arith.constant 0 : index
    %4 = vector.load %arg2[%c0_3, %c0_4] : memref<2x16xf32, #tpu.memory_space<vmem>>, vector<2x16xf32>
    %cst = arith.constant 0.000000e+00 : f32
    %5 = vector.broadcast %cst : f32 to vector<2x16xf32>
    %6 = arith.cmpf ogt, %4, %5 : vector<2x16xf32>
    %7 = vector.shape_cast %3 : vector<2x16x32xf32> to vector<32x32xf32>
    %c0_5 = arith.constant 0 : index
    %c0_6 = arith.constant 0 : index
    %8 = vector.load %arg4[%c0_5, %c0_6] : memref<32x32xf32, #tpu.memory_space<vmem>>, vector<32x32xf32>
    %cst_7 = arith.constant dense<0.000000e+00> : vector<32x32xf32>
    %9 = tpu.matmul %7, %8, %cst_7 {dimension_numbers = #tpu.dot_dimension_numbers<[1], [0], [0], [1], [0, 0, 1, 1], [], []>} : vector<32x32xf32>, vector<32x32xf32>, vector<32x32xf32> -> vector<32x32xf32>
    %c0_8 = arith.constant 0 : index
    %c0_9 = arith.constant 0 : index
    %10 = vector.load %arg5[%c0_8, %c0_9] : memref<1x32xf32, #tpu.memory_space<vmem>>, vector<1x32xf32>
    %11 = vector.broadcast %10 : vector<1x32xf32> to vector<32x32xf32>
    %12 = arith.addf %9, %11 : vector<32x32xf32>
    %13 = math.tanh %12 : vector<32x32xf32>
    %14 = vector.shape_cast %13 : vector<32x32xf32> to vector<2x16x32xf32>
    %c0_10 = arith.constant 0 : index
    %c0_11 = arith.constant 0 : index
    %15 = vector.load %arg6[%c0_10, %c0_11] : memref<1x32xf32, #tpu.memory_space<vmem>>, vector<1x32xf32>
    %16 = vector.shape_cast %15 : vector<1x32xf32> to vector<1x1x32xf32>
    %17 = vector.broadcast %16 : vector<1x1x32xf32> to vector<2x16x32xf32>
    %18 = arith.mulf %14, %17 : vector<2x16x32xf32>
    %cst_12 = arith.constant dense<0.000000e+00> : vector<2x16xf32>
    %19 = vector.multi_reduction <add>, %18, %cst_12 [2] : vector<2x16x32xf32> to vector<2x16xf32>
    %cst_13 = arith.constant -1.000000e+30 : f32
    %20 = vector.broadcast %cst_13 : f32 to vector<2x16xf32>
    %21 = arith.select %6, %19, %20 : vector<2x16xi1>, vector<2x16xf32>
    %c0_14 = arith.constant 0 : index
    %c0_15 = arith.constant 0 : index
    %22 = vector.load %arg8[%c0_14, %c0_15] : memref<2x1xf32, #tpu.memory_space<vmem>>, vector<2x1xf32>
    %cst_16 = arith.constant dense<0xFF800000> : vector<2xf32>
    %23 = vector.multi_reduction <maximumf>, %21, %cst_16 [1] : vector<2x16xf32> to vector<2xf32>
    %24 = vector.shape_cast %23 : vector<2xf32> to vector<2x1xf32>
    %25 = arith.maximumf %22, %24 : vector<2x1xf32>
    %26 = arith.subf %22, %25 : vector<2x1xf32>
    %27 = math.exp %26 : vector<2x1xf32>
    %28 = vector.broadcast %25 : vector<2x1xf32> to vector<2x16xf32>
    %29 = arith.subf %21, %28 : vector<2x16xf32>
    %30 = math.exp %29 : vector<2x16xf32>
    %cst_17 = arith.constant 0.000000e+00 : f32
    %31 = vector.broadcast %cst_17 : f32 to vector<2x16xf32>
    %32 = arith.select %6, %30, %31 : vector<2x16xi1>, vector<2x16xf32>
    %c0_18 = arith.constant 0 : index
    %c0_19 = arith.constant 0 : index
    %33 = vector.load %arg9[%c0_18, %c0_19] : memref<2x1xf32, #tpu.memory_space<vmem>>, vector<2x1xf32>
    %34 = arith.mulf %27, %33 : vector<2x1xf32>
    %cst_20 = arith.constant dense<0.000000e+00> : vector<2xf32>
    %35 = vector.multi_reduction <add>, %32, %cst_20 [1] : vector<2x16xf32> to vector<2xf32>
    %36 = vector.shape_cast %35 : vector<2xf32> to vector<2x1xf32>
    %37 = arith.addf %34, %36 : vector<2x1xf32>
    %c0_21 = arith.constant 0 : index
    %c0_22 = arith.constant 0 : index
    %38 = vector.load %arg9[%c0_21, %c0_22] : memref<2x1xf32, #tpu.memory_space<vmem>>, vector<2x1xf32>
    tpu.vector_store %arg9[%c0_21, %c0_22], %37 {strides = array<i32>} : memref<2x1xf32, #tpu.memory_space<vmem>>, vector<2x1xf32>,
    %39 = vector.shape_cast %32 : vector<2x16xf32> to vector<2x16x1xf32>
    %40 = vector.broadcast %39 : vector<2x16x1xf32> to vector<2x16x32xf32>
    %41 = arith.mulf %40, %3 : vector<2x16x32xf32>
    %c0_23 = arith.constant 0 : index
    %c0_24 = arith.constant 0 : index
    %42 = vector.load %arg10[%c0_23, %c0_24] : memref<2x32xf32, #tpu.memory_space<vmem>>, vector<2x32xf32>
    %43 = vector.broadcast %27 : vector<2x1xf32> to vector<2x32xf32>
    %44 = arith.mulf %43, %42 : vector<2x32xf32>
    %cst_25 = arith.constant dense<0.000000e+00> : vector<2x32xf32>
    %45 = vector.multi_reduction <add>, %41, %cst_25 [1] : vector<2x16x32xf32> to vector<2x32xf32>
    %46 = arith.addf %44, %45 : vector<2x32xf32>
    %c0_26 = arith.constant 0 : index
    %c0_27 = arith.constant 0 : index
    %47 = vector.load %arg10[%c0_26, %c0_27] : memref<2x32xf32, #tpu.memory_space<vmem>>, vector<2x32xf32>
    tpu.vector_store %arg10[%c0_26, %c0_27], %46 {strides = array<i32>} : memref<2x32xf32, #tpu.memory_space<vmem>>, vector<2x32xf32>,
    %c0_28 = arith.constant 0 : index
    %c0_29 = arith.constant 0 : index
    %48 = vector.load %arg11[%c0_28, %c0_29] : memref<2x32xf32, #tpu.memory_space<vmem>>, vector<2x32xf32>
    %49 = vector.broadcast %27 : vector<2x1xf32> to vector<2x32xf32>
    %50 = arith.mulf %49, %48 : vector<2x32xf32>
    %51 = arith.mulf %41, %3 : vector<2x16x32xf32>
    %cst_30 = arith.constant dense<0.000000e+00> : vector<2x32xf32>
    %52 = vector.multi_reduction <add>, %51, %cst_30 [1] : vector<2x16x32xf32> to vector<2x32xf32>
    %53 = arith.addf %50, %52 : vector<2x32xf32>
    %c0_31 = arith.constant 0 : index
    %c0_32 = arith.constant 0 : index
    %54 = vector.load %arg11[%c0_31, %c0_32] : memref<2x32xf32, #tpu.memory_space<vmem>>, vector<2x32xf32>
    tpu.vector_store %arg11[%c0_31, %c0_32], %53 {strides = array<i32>} : memref<2x32xf32, #tpu.memory_space<vmem>>, vector<2x32xf32>,
    %c0_33 = arith.constant 0 : index
    %c0_34 = arith.constant 0 : index
    %55 = vector.load %arg8[%c0_33, %c0_34] : memref<2x1xf32, #tpu.memory_space<vmem>>, vector<2x1xf32>
    tpu.vector_store %arg8[%c0_33, %c0_34], %25 {strides = array<i32>} : memref<2x1xf32, #tpu.memory_space<vmem>>, vector<2x1xf32>,
    %c0_i32_35 = arith.constant 0 : i32
    %56 = arith.cmpi eq, %arg1, %c0_i32_35 : i32
    %57 = arith.extui %56 : i1 to i32
    %c0_i32_36 = arith.constant 0 : i32
    %58 = arith.cmpi ne, %57, %c0_i32_36 : i32
    scf.if %58 {
      %c0_37 = arith.constant 0 : index
      %c0_38 = arith.constant 0 : index
      %59 = vector.load %arg9[%c0_37, %c0_38] : memref<2x1xf32, #tpu.memory_space<vmem>>, vector<2x1xf32>
      %cst_39 = arith.constant 1.000000e-30 : f32
      %60 = vector.broadcast %cst_39 : f32 to vector<2x1xf32>
      %61 = arith.maximumf %59, %60 : vector<2x1xf32>
      %c0_40 = arith.constant 0 : index
      %c0_41 = arith.constant 0 : index
      %62 = vector.load %arg10[%c0_40, %c0_41] : memref<2x32xf32, #tpu.memory_space<vmem>>, vector<2x32xf32>
      %63 = vector.broadcast %61 : vector<2x1xf32> to vector<2x32xf32>
      %64 = arith.divf %62, %63 : vector<2x32xf32>
      %c0_42 = arith.constant 0 : index
      %c0_43 = arith.constant 0 : index
      %65 = vector.load %arg11[%c0_42, %c0_43] : memref<2x32xf32, #tpu.memory_space<vmem>>, vector<2x32xf32>
      %66 = vector.broadcast %61 : vector<2x1xf32> to vector<2x32xf32>
      %67 = arith.divf %65, %66 : vector<2x32xf32>
      %c0_44 = arith.constant 0 : index
      %c0_45 = arith.constant 0 : index
      %68 = vector.load %arg7[%c0_44, %c0_45] : memref<2x64xf32, #tpu.memory_space<vmem>>, vector<2x32xf32>
      tpu.vector_store %arg7[%c0_44, %c0_45], %64 {strides = array<i32>} : memref<2x64xf32, #tpu.memory_space<vmem>>, vector<2x32xf32>,
      %69 = arith.mulf %64, %64 : vector<2x32xf32>
      %70 = arith.subf %67, %69 : vector<2x32xf32>
      %cst_46 = arith.constant 9.99999974E-6 : f32
      %71 = vector.broadcast %cst_46 : f32 to vector<2x32xf32>
      %72 = arith.maximumf %70, %71 : vector<2x32xf32>
      %73 = math.sqrt %72 : vector<2x32xf32>
      %c0_47 = arith.constant 0 : index
      %c32 = arith.constant 32 : index
      %74 = vector.load %arg7[%c0_47, %c32] : memref<2x64xf32, #tpu.memory_space<vmem>>, vector<2x32xf32>
      tpu.vector_store %arg7[%c0_47, %c32], %73 {strides = array<i32>} : memref<2x64xf32, #tpu.memory_space<vmem>>, vector<2x32xf32>,
    } else {
    }
    return
  }
  func.func @transform_0(%arg0: i32, %arg1: i32) -> (i32, i32) {
    %c0_i32 = arith.constant 0 : i32
    return %arg0, %arg1 : i32, i32
  }
  func.func @transform_1(%arg0: i32, %arg1: i32) -> (i32, i32, i32) {
    %c0_i32 = arith.constant 0 : i32
    %c0_i32_0 = arith.constant 0 : i32
    return %arg0, %arg1, %c0_i32 : i32, i32, i32
  }
  func.func @transform_2(%arg0: i32, %arg1: i32) -> (i32, i32) {
    %c0_i32 = arith.constant 0 : i32
    %c0_i32_0 = arith.constant 0 : i32
    %c0_i32_1 = arith.constant 0 : i32
    return %c0_i32, %c0_i32_0 : i32, i32
  }
  func.func @transform_3(%arg0: i32, %arg1: i32) -> (i32, i32) {
    %c0_i32 = arith.constant 0 : i32
    %c0_i32_0 = arith.constant 0 : i32
    %c0_i32_1 = arith.constant 0 : i32
    return %c0_i32, %c0_i32_0 : i32, i32
  }
  func.func @transform_4(%arg0: i32, %arg1: i32) -> (i32, i32) {
    %c0_i32 = arith.constant 0 : i32
    %c0_i32_0 = arith.constant 0 : i32
    %c0_i32_1 = arith.constant 0 : i32
    return %c0_i32, %c0_i32_0 : i32, i32
  }
  func.func @transform_5(%arg0: i32, %arg1: i32) -> (i32, i32) {
    %c0_i32 = arith.constant 0 : i32
    %c0_i32_0 = arith.constant 0 : i32
    return %arg0, %c0_i32 : i32, i32
  }
}

</mosaic_0001>

<llo_original>
// kernel: tpu_custom_call.1
$region0: #{tpu_custom_call.1}
  #allocation0 [shape = 'u32[]', space=smem, size = 0x4, offset = 0x4, fixed_abs, tag = 'smem constant byte address 0x4 - core index']
  #allocation1 [shape = 'u32[144,128]{1,0:T(1,128)}', space=vmem, size = 0x12000, scoped, tag = 'internal scratch']
  #allocation2 [shape = 'f32[2,1]{1,0:T(2,128)}', space=vmem, size = 0x400, scoped, tag = 'scratch operand']
  #allocation3 [shape = 'f32[2,1]{1,0:T(2,128)}', space=vmem, size = 0x400, scoped, tag = 'scratch operand']
  #allocation4 [shape = 'f32[2,32]{1,0:T(2,128)}', space=vmem, size = 0x400, scoped, tag = 'scratch operand']
  #allocation5 [shape = 'f32[2,32]{1,0:T(2,128)}', space=vmem, size = 0x400, scoped, tag = 'scratch operand']
  %s0 = inlined_call_operand.hbm [shape: f32[2,16], index: 0, kind: input, shape index: {}]
  %s1 = inlined_call_operand.hbm [shape: f32[2,16,32], index: 1, kind: input, shape index: {}]
  %s2 = inlined_call_operand.hbm [shape: f32[32,32], index: 2, kind: input, shape index: {}]
  %s3 = inlined_call_operand.vmem [shape: f32[1,32], index: 3, kind: input, shape index: {}]
  %s4 = inlined_call_operand.vmem [shape: f32[1,32], index: 4, kind: input, shape index: {}]
  %s5 = inlined_call_operand.hbm [shape: f32[2,64], index: 5, kind: output, shape index: {}]
  %s6 = sld [smem:[#allocation0]]
  $region50: #{tpu_custom_call.1} parent=0
    _
  %s8 = ssub.s32 1, %s6
  %s9 = scalar_select 0, %s8, %s6
  $region1: #{tpu_custom_call.1} parent=0
    #allocation6 [shape = 'u8[1024]{0}', space=vmem, size = 0x400, scoped, tag = 'input window, operand 0, single buffered']
    #allocation7 [shape = 's32[1]{0}', space=sflag, size = 0x4, scoped, tag = 'scoped memory for tpu_custom_call.1']
    #allocation8 [shape = 's32[1]{0}', space=sflag, size = 0x4, scoped, tag = 'scoped memory for tpu_custom_call.1']
    #allocation9 [shape = 'u8[16384]{0}', space=vmem, size = 0x4000, scoped, tag = 'input window, operand 1, single buffered']
    #allocation10 [shape = 's32[1]{0}', space=sflag, size = 0x4, scoped, tag = 'scoped memory for tpu_custom_call.1']
    #allocation11 [shape = 'u8[16384]{0}', space=vmem, size = 0x4000, scoped, tag = 'input window, operand 2, single buffered']
    #allocation12 [shape = 'u8[1024]{0}', space=vmem, size = 0x400, scoped, tag = 'output window, operand 0, single buffered']
    %10 = vsyncpa [#allocation7], 0
    %11 = vsyncpa [#allocation10], 0
    %12 = vsyncpa [#allocation8], 0
    // Predicated region
    $region2: #{tpu_custom_call.1} parent=1 // pred_check
      _
    $region3: #{tpu_custom_call.1} parent=1 // pred_check_branch
      %14 = sbr.rel (0) target = $region5
    $region4: #{tpu_custom_call.1} parent=1 // pred_region
      %s16 = ssub.s32 32, 32
      %17 = vsyncadd [#allocation7], %s16
      %s19 = sshll.u32 [#allocation6], 4
      %s20 = int_to_ptr.vmem [resolvable:$true] %s19
      %22 = dma.hbm_to_vmem [thread:$0]  %s0, 32, %s20, [#allocation7]
    $region5: #{tpu_custom_call.1} parent=1 // pred_fallthru
      _
    // Predicated region
    $region6: #{tpu_custom_call.1} parent=1 // pred_check
      _
    $region7: #{tpu_custom_call.1} parent=1 // pred_check_branch
      %24 = sbr.rel (0) target = $region9
    $region8: #{tpu_custom_call.1} parent=1 // pred_region
      %s26 = ssub.s32 512, 512
      %27 = vsyncadd [#allocation10], %s26
      %s28 = sshll.u32 [#allocation9], 4
      %s29 = int_to_ptr.vmem [resolvable:$true] %s28
      %34 = dma.hbm_to_vmem [thread:$0]  %s1, 512, %s29, [#allocation10], 128, 128, 8
    $region9: #{tpu_custom_call.1} parent=1 // pred_fallthru
      _
    // Predicated region
    $region10: #{tpu_custom_call.1} parent=1 // pred_check
      _
    $region11: #{tpu_custom_call.1} parent=1 // pred_check_branch
      %36 = sbr.rel (0) target = $region13
    $region12: #{tpu_custom_call.1} parent=1 // pred_region
      %s38 = ssub.s32 512, 512
      %39 = vsyncadd [#allocation10], %s38
      %s40 = sshll.u32 [#allocation11], 4
      %s41 = int_to_ptr.vmem [resolvable:$true] %s40
      %46 = dma.hbm_to_vmem [thread:$0]  %s2, 512, %s41, [#allocation10], 128, 128, 8
    $region13: #{tpu_custom_call.1} parent=1 // pred_fallthru
      _
    // Predicated region
    $region14: #{tpu_custom_call.1} parent=1 // pred_check
      _
    $region15: #{tpu_custom_call.1} parent=1 // pred_check_branch
      %48 = sbr.rel (0) target = $region17
    $region16: #{tpu_custom_call.1} parent=1 // pred_region
      _
    $region17: #{tpu_custom_call.1} parent=1 // pred_fallthru
      _
    // Predicated region
    $region18: #{tpu_custom_call.1} parent=1 // pred_check
      _
    $region19: #{tpu_custom_call.1} parent=1 // pred_check_branch
      %50 = sbr.rel (0) target = $region21
    $region20: #{tpu_custom_call.1} parent=1 // pred_region
      _
    $region21: #{tpu_custom_call.1} parent=1 // pred_fallthru
      _
    // Predicated region
    $region22: #{tpu_custom_call.1} parent=1 // pred_check
      _
    $region23: #{tpu_custom_call.1} parent=1 // pred_check_branch
      %52 = sbr.rel (0) target = $region25
    $region24: #{tpu_custom_call.1} parent=1 // pred_region
      %53 = dma.done [#allocation7], 32
    $region25: #{tpu_custom_call.1} parent=1 // pred_fallthru
      _
    // Predicated region
    $region26: #{tpu_custom_call.1} parent=1 // pred_check
      _
    $region27: #{tpu_custom_call.1} parent=1 // pred_check_branch
      %55 = sbr.rel (0) target = $region29
    $region28: #{tpu_custom_call.1} parent=1 // pred_region
      %56 = dma.done [#allocation10], 512
    $region29: #{tpu_custom_call.1} parent=1 // pred_fallthru
      _
    // Predicated region
    $region30: #{tpu_custom_call.1} parent=1 // pred_check
      _
    $region31: #{tpu_custom_call.1} parent=1 // pred_check_branch
      %58 = sbr.rel (0) target = $region33
    $region32: #{tpu_custom_call.1} parent=1 // pred_region
      %59 = dma.done [#allocation10], 512
    $region33: #{tpu_custom_call.1} parent=1 // pred_fallthru
      _
    %p60 = scmp.eq.s32.totalorder 0, 0
    // Predicated region
    $region34: #{tpu_custom_call.1} parent=1 // pred_check
      %p61 = pneg %p60
    $region35: #{tpu_custom_call.1} parent=1 // pred_check_branch
      %63 = sbr.rel (%p61) target = $region37
    $region36: #{tpu_custom_call.1} parent=1 // pred_region
      %vm64 = vcmask 1024
      %65 = vst.msk [vmem:[#allocation2] sm:$0x3] %vm64, -inf
      %66 = vst.msk [vmem:[#allocation3] sm:$0x3] %vm64, 0.0
      %vm67 = vcmask 254976
      %68 = vst.msk [vmem:[#allocation4] sm:$0x3] %vm67, 0.0
      %69 = vst.msk [vmem:[#allocation5] sm:$0x3] %vm67, 0.0
    $region37: #{tpu_custom_call.1} parent=1 // pred_fallthru
      _
    %v70 = vld [vmem:[#allocation9] sm:$0xff]
    %v71 = vld [vmem:[#allocation9 + $0x8] sm:$0xff]
    %v72 = vld [vmem:[#allocation9 + $0x10] sm:$0xff]
    %v73 = vld [vmem:[#allocation9 + $0x18] sm:$0xff]
    %v74 = vld [vmem:[#allocation6] sm:$0x3]
    %vm75 = vcmp.gt.f32.partialorder %v74, 0.0
    %v76 = vld [vmem:[#allocation11] sm:$0xff]
    %v77 = vld [vmem:[#allocation11 + $0x8] sm:$0xff]
    %v78 = vld [vmem:[#allocation11 + $0x10] sm:$0xff]
    %v79 = vld [vmem:[#allocation11 + $0x18] sm:$0xff]
    %v80 = vld [vmem:[%s3] sm:$0x1]
    %v82 = vlaneseq
    %v83 = vshrl.u32 %v82, 7
    %v84 = vsub.s32 0, %v83
    %v85 = vrot.slane %v80, %v84
    %vm87 = vcmask 261120
    %v89 = vsel %vm87, %v70, 0
    %v92 = vsel %vm87, %v71, 0
    %v95 = vsel %vm87, %v72, 0
    %v98 = vsel %vm87, %v73, 0
    %100 = vmatprep.subr.mxu0 0.0
    %101 = vmatpush1.msra.mxu0 %v76
    %102 = vmatprep.subr.mxu0 0.0
    %103 = vmatpush1.msra.mxu0 %v77
    %104 = vmatprep.subr.mxu0 0.0
    %105 = vmatpush1.msra.mxu0 %v78
    %106 = vmatprep.subr.mxu0 0.0
    %107 = vmatpush1.msra.mxu0 %v79
    %108 = vmatprep.subr.mxu0 0.0
    %109 = vmatpush1.msra.mxu0 0.0
    %110 = vmatprep.subr.mxu0 0.0
    %111 = vmatpush1.msra.mxu0 0.0
    %112 = vmatprep.subr.mxu0 0.0
    %113 = vmatpush1.msra.mxu0 0.0
    %114 = vmatprep.subr.mxu0 0.0
    %115 = vmatpush1.msra.mxu0 0.0
    %116 = vmatprep.subr.mxu0 0.0
    %117 = vmatpush1.msra.mxu0 0.0
    %118 = vmatprep.subr.mxu0 0.0
    %119 = vmatpush1.msra.mxu0 0.0
    %120 = vmatprep.subr.mxu0 0.0
    %121 = vmatpush1.msra.mxu0 0.0
    %122 = vmatprep.subr.mxu0 0.0
    %123 = vmatpush1.msra.mxu0 0.0
    %124 = vmatprep.subr.mxu0 0.0
    %125 = vmatpush1.msra.mxu0 0.0
    %126 = vmatprep.subr.mxu0 0.0
    %127 = vmatpush1.msra.mxu0 0.0
    %128 = vmatprep.subr.mxu0 0.0
    %129 = vmatpush1.msra.mxu0 0.0
    %130 = vmatprep.subr.mxu0 0.0
    %131 = vmatpush1.msra.mxu0 0.0
    %132 = vmatprep.subr.mxu0 0.0
    %133 = vmatpush1.msra.mxu0 0.0
    %134 = vmatprep.subr.mxu0 0.0
    %135 = vmatpush1.msra.mxu0 0.0
    %136 = vmatprep.subr.mxu0 0.0
    %137 = vmatpush1.msra.mxu0 0.0
    %138 = vmatprep.subr.mxu0 0.0
    %139 = vmatpush1.msra.mxu0 0.0
    %140 = vmatprep.subr.mxu0 0.0
    %141 = vmatpush1.msra.mxu0 0.0
    %142 = vmatprep.subr.mxu0 0.0
    %143 = vmatpush1.msra.mxu0 0.0
    %144 = vmatprep.subr.mxu0 0.0
    %145 = vmatpush1.msra.mxu0 0.0
    %146 = vmatprep.subr.mxu0 0.0
    %147 = vmatpush1.msra.mxu0 0.0
    %148 = vmatprep.subr.mxu0 0.0
    %149 = vmatpush1.msra.mxu0 0.0
    %150 = vmatprep.subr.mxu0 0.0
    %151 = vmatpush1.msra.mxu0 0.0
    %152 = vmatprep.subr.mxu0 0.0
    %153 = vmatpush1.msra.mxu0 0.0
    %154 = vmatprep.subr.mxu0 0.0
    %155 = vmatpush1.msra.mxu0 0.0
    %156 = vmatprep.subr.mxu0 0.0
    %157 = vmatpush1.msra.mxu0 0.0
    %158 = vmatprep.subr.mxu0 0.0
    %159 = vmatpush1.msra.mxu0 0.0
    %160 = vmatprep.subr.mxu0 0.0
    %161 = vmatpush1.msra.mxu0 0.0
    %162 = vmatprep.subr.mxu0 0.0
    %163 = vmatpush1.msra.mxu0 0.0
    %164 = vmatprep.mubr.f32.mxu0 0.0
    %165 = vmatmul.mubr.f32.gmra.mrb[0].mxu0 %v89
    %v166 = vpop.f32.mrb[0].mxu0
    %v167 = vadd.f32 %v85, %v166
    %v168 = vpop.f32.mrb[0].mxu0
    %169 = vmatprep.mubr.f32.mxu0 0.0
    %170 = vmatmul.mubr.f32.gmra.mrb[0].mxu0 %v92
    %v171 = vpop.f32.mrb[0].mxu0
    %v172 = vadd.f32 %v85, %v171
    %v173 = vpop.f32.mrb[0].mxu0
    %174 = vmatprep.mubr.f32.mxu0 0.0
    %175 = vmatmul.mubr.f32.gmra.mrb[0].mxu0 %v95
    %v176 = vpop.f32.mrb[0].mxu0
    %v177 = vadd.f32 %v85, %v176
    %v178 = vpop.f32.mrb[0].mxu0
    %179 = vmatprep.mubr.f32.mxu0 0.0
    %180 = vmatmul.mubr.f32.gmra.mrb[0].mxu0 %v98
    %v181 = vpop.f32.mrb[0].mxu0
    %v182 = vadd.f32 %v85, %v181
    %v183 = vpop.f32.mrb[0].mxu0
    %184 = vdwg.mxu0
    %v185 = vtanh.pop %v167
    %v186 = vtanh.pop %v172
    %v187 = vtanh.pop %v177
    %v188 = vtanh.pop %v182
    %v189 = vld [vmem:[%s4] sm:$0x1]
    %v191 = vlaneseq
    %v192 = vshrl.u32 %v191, 7
    %v193 = vsub.s32 0, %v192
    %v194 = vrot.slane %v189, %v193
    %v196 = vmul.f32 %v185, %v194
    %v197 = vmul.f32 %v186, %v194
    %v198 = vmul.f32 %v187, %v194
    %v199 = vmul.f32 %v188, %v194
    %v200 = vsel %vm87, %v196, 0.0
    %201 = vadd.xlane.f32.xlu0 %v200
    %v202 = vpop.xlane.xlu0 %201
    %v203 = vsel %vm87, %v197, 0.0
    %204 = vadd.xlane.f32.xlu0 %v203
    %v205 = vpop.xlane.xlu0 %204
    %v206 = vsel %vm87, %v198, 0.0
    %207 = vadd.xlane.f32.xlu0 %v206
    %v208 = vpop.xlane.xlu0 %207
    %v209 = vsel %vm87, %v199, 0.0
    %210 = vadd.xlane.f32.xlu0 %v209
    %v211 = vpop.xlane.xlu0 %210
    %v216 = vlaneseq
    %v217 = vand.u32 %v216, 127
    %v218 = vlaneseq
    %v219 = vshrl.u32 %v218, 7
    %v220 = vsub.s32 %v217, %v219
    %v221 = vrot.slane %v202, %v220
    %v222 = vadd.s32 %v217, 4294967288
    %v223 = vlaneseq
    %v224 = vshrl.u32 %v223, 7
    %v225 = vsub.s32 %v222, %v224
    %v226 = vrot.slane %v205, %v225
    %vm227 = vcmask 130112
    %v228 = vsel %vm227, %v226, %v221
    %v229 = vlaneseq
    %v230 = vshrl.u32 %v229, 7
    %v231 = vsub.s32 %v217, %v230
    %v232 = vrot.slane %v208, %v231
    %v233 = vlaneseq
    %v234 = vshrl.u32 %v233, 7
    %v235 = vsub.s32 %v222, %v234
    %v236 = vrot.slane %v211, %v235
    %v237 = vsel %vm227, %v236, %v232
    %vm238 = vcmask 1041409
    %v239 = vsel %vm238, %v237, %v228
    %v241 = vsel %vm75, %v239, -1e+30
    %v242 = vld [vmem:[#allocation2] sm:$0x3]
    %vm243 = vcmask 123904
    %v244 = vsel %vm243, %v241, -inf
    %245 = vmax.xlane.f32.xlu0 %v244
    %v246 = vpop.xlane.xlu0 %245
    %v247 = vmax.f32 %v242, %v246
    %v248 = vsub.f32 %v242, %v247
    %v249 = vmul.f32 %v248, 1.442695
    %v250 = vpow.pop %v249
    %252 = vset.pattern.permute.xlu0 0
    %253 = vperm.xlu0 %252, %v247
    %v254 = vpop.permute.xlu0 %253
    %v256 = vsub.f32 %v241, %v254
    %v257 = vmul.f32 %v256, 1.442695
    %v258 = vpow.pop %v257
    %v259 = vsel %vm75, %v258, 0.0
    %v260 = vld [vmem:[#allocation3] sm:$0x3]
    %v261 = vmul.f32 %v250, %v260
    %v262 = vsel %vm243, %v259, 0.0
    %263 = vadd.xlane.f32.xlu0 %v262
    %v264 = vpop.xlane.xlu0 %263
    %v265 = vadd.f32 %v261, %v264
    %vm266 = vcmask 1024
    %267 = vst.msk [vmem:[#allocation3] sm:$0x3] %vm266, %v265
    %v268 = vlaneseq
    %v269 = vshrl.u32 %v268, 7
    %v270 = vsub.s32 0, %v269
    %v271 = vrot.slane %v259, %v270
    %273 = vbcast.lane.b32.xlu0 %v271, 256
    %v274 = vpop.permute.xlu0 %273
    %s276 = sor.u32 256, 8
    %277 = vbcast.lane.b32.xlu0 %v271, %s276
    %v278 = vpop.permute.xlu0 %277
    %v279 = vlaneseq
    %v280 = vshrl.u32 %v279, 7
    %v281 = vsub.s32 1, %v280
    %v282 = vrot.slane %v259, %v281
    %284 = vbcast.lane.b32.xlu0 %v282, 256
    %v285 = vpop.permute.xlu0 %284
    %s287 = sor.u32 256, 8
    %288 = vbcast.lane.b32.xlu0 %v282, %s287
    %v289 = vpop.permute.xlu0 %288
    %v290 = vmul.f32 %v274, %v70
    %v291 = vmul.f32 %v278, %v71
    %v292 = vmul.f32 %v285, %v72
    %v293 = vmul.f32 %v289, %v73
    %v294 = vld [vmem:[#allocation4] sm:$0x3]
    %296 = vset.pattern.permute.xlu0 0
    %297 = vperm.xlu0 %296, %v250
    %v298 = vpop.permute.xlu0 %297
    %v300 = vmul.f32 %v298, %v294
    %v301 = vsel %vm87, %v290, 0.0
    %v302 = vsel %vm87, %v291, 0.0
    %v303 = vadd.f32 %v301, %v302
    %v304 = vrot.slane %v303, 4
    %v305 = vadd.f32 %v303, %v304
    %v306 = vrot.slane %v305, 2
    %v307 = vadd.f32 %v305, %v306
    %v308 = vrot.slane %v307, 1
    %v309 = vadd.f32 %v307, %v308
    %v310 = vsel %vm87, %v292, 0.0
    %v311 = vsel %vm87, %v293, 0.0
    %v312 = vadd.f32 %v310, %v311
    %v313 = vrot.slane %v312, 4
    %v314 = vadd.f32 %v312, %v313
    %v315 = vrot.slane %v314, 2
    %v316 = vadd.f32 %v314, %v315
    %v317 = vrot.slane %v316, 1
    %v318 = vadd.f32 %v316, %v317
    %v321 = vsel %vm238, %v318, %v309
    %v323 = vadd.f32 %v300, %v321
    %vm324 = vcmask 254976
    %325 = vst.msk [vmem:[#allocation4] sm:$0x3] %vm324, %v323
    %v326 = vld [vmem:[#allocation5] sm:$0x3]
    %v327 = vmul.f32 %v298, %v326
    %v328 = vmul.f32 %v290, %v70
    %v329 = vmul.f32 %v291, %v71
    %v330 = vmul.f32 %v292, %v72
    %v331 = vmul.f32 %v293, %v73
    %v332 = vsel %vm87, %v328, 0.0
    %v333 = vsel %vm87, %v329, 0.0
    %v334 = vadd.f32 %v332, %v333
    %v335 = vrot.slane %v334, 4
    %v336 = vadd.f32 %v334, %v335
    %v337 = vrot.slane %v336, 2
    %v338 = vadd.f32 %v336, %v337
    %v339 = vrot.slane %v338, 1
    %v340 = vadd.f32 %v338, %v339
    %v341 = vsel %vm87, %v330, 0.0
    %v342 = vsel %vm87, %v331, 0.0
    %v343 = vadd.f32 %v341, %v342
    %v344 = vrot.slane %v343, 4
    %v345 = vadd.f32 %v343, %v344
    %v346 = vrot.slane %v345, 2
    %v347 = vadd.f32 %v345, %v346
    %v348 = vrot.slane %v347, 1
    %v349 = vadd.f32 %v347, %v348
    %v352 = vsel %vm238, %v349, %v340
    %v354 = vadd.f32 %v327, %v352
    %355 = vst.msk [vmem:[#allocation5] sm:$0x3] %vm324, %v354
    %356 = vst.msk [vmem:[#allocation2] sm:$0x3] %vm266, %v247
    // Predicated region
    $region38: #{tpu_custom_call.1} parent=1 // pred_check
      %p357 = pneg %p60
    $region39: #{tpu_custom_call.1} parent=1 // pred_check_branch
      %359 = sbr.rel (%p357) target = $region41
    $region40: #{tpu_custom_call.1} parent=1 // pred_region
      %v360 = vld [vmem:[#allocation3] sm:$0x3]
      %v361 = vmax.f32 %v360, 1e-30
      %v362 = vld [vmem:[#allocation4] sm:$0x3]
      %364 = vset.pattern.permute.xlu0 0
      %365 = vperm.xlu0 %364, %v361
      %v366 = vpop.permute.xlu0 %365
      %v368 = vrcp.pop %v366
      %v369 = vmul.f32 %v362, %v368
      %v370 = vld [vmem:[#allocation5] sm:$0x3]
      %v371 = vmul.f32 %v370, %v368
      %372 = vst.msk [vmem:[#allocation12] sm:$0x3] %vm324, %v369
      %v373 = vmul.f32 %v369, %v369
      %v374 = vsub.f32 %v371, %v373
      %v375 = vmax.f32 %v374, 1e-05
      %v376 = vrsqrt.pop %v375
      %v377 = vmul.f32 %v375, %v376
      %vm378 = vcmp.eq.f32.partialorder %v375, inf
      %v379 = vsel %vm378, %v375, %v377
      %vm380 = vcmp.eq.f32.partialorder %v375, 0.0
      %v381 = vand.u32 %v375, 2147483648
      %v382 = vsel %vm380, %v381, %v379
      %384 = vrot.lane.b32.xlu0 %v382, 32
      %v385 = vpop.permute.xlu0 %384
      %vm387 = vcmask 517376
      %388 = vst.msk [vmem:[#allocation12] sm:$0x3] %vm387, %v385
    $region41: #{tpu_custom_call.1} parent=1 // pred_fallthru
      _
    // Predicated region
    $region42: #{tpu_custom_call.1} parent=1 // pred_check
      _
    $region43: #{tpu_custom_call.1} parent=1 // pred_check_branch
      %390 = sbr.rel (0) target = $region45
    $region44: #{tpu_custom_call.1} parent=1 // pred_region
      %s392 = ssub.s32 32, 32
      %393 = vsyncadd [#allocation8], %s392
      %s395 = sshll.u32 [#allocation12], 4
      %s396 = int_to_ptr.vmem [resolvable:$true] %s395
      %398 = dma.vmem_to_hbm [thread:$0]  %s396, 32, %s5, [#allocation8]
    $region45: #{tpu_custom_call.1} parent=1 // pred_fallthru
      _
    // Predicated region
    $region46: #{tpu_custom_call.1} parent=1 // pred_check
      _
    $region47: #{tpu_custom_call.1} parent=1 // pred_check_branch
      %400 = sbr.rel (0) target = $region49
    $region48: #{tpu_custom_call.1} parent=1 // pred_region
      %401 = dma.done [#allocation8], 32
    $region49: #{tpu_custom_call.1} parent=1 // pred_fallthru
      _
    %402 = vsyncpa [#allocation7], 1
    %403 = vsyncpa [#allocation10], 1
    %404 = vsyncpa [#allocation8], 1

// kernel: tpu_custom_call.1
$region0: #{tpu_custom_call.1}
  #allocation0 [shape = 'u32[]', space=smem, size = 0x4, offset = 0x4, fixed_abs, tag = 'smem constant byte address 0x4 - core index']
  #allocation1 [shape = 'u32[144,128]{1,0:T(1,128)}', space=vmem, size = 0x12000, scoped, tag = 'internal scratch']
  #allocation2 [shape = 'f32[2,1]{1,0:T(2,128)}', space=vmem, size = 0x400, scoped, tag = 'scratch operand']
  #allocation3 [shape = 'f32[2,1]{1,0:T(2,128)}', space=vmem, size = 0x400, scoped, tag = 'scratch operand']
  #allocation4 [shape = 'f32[2,32]{1,0:T(2,128)}', space=vmem, size = 0x400, scoped, tag = 'scratch operand']
  #allocation5 [shape = 'f32[2,32]{1,0:T(2,128)}', space=vmem, size = 0x400, scoped, tag = 'scratch operand']
  %s0 = inlined_call_operand.hbm [shape: f32[2,16], index: 0, kind: input, shape index: {}]
  %s1 = inlined_call_operand.hbm [shape: f32[2,16,32], index: 1, kind: input, shape index: {}]
  %s2 = inlined_call_operand.hbm [shape: f32[32,32], index: 2, kind: input, shape index: {}]
  %s3 = inlined_call_operand.vmem [shape: f32[1,32], index: 3, kind: input, shape index: {}]
  %s4 = inlined_call_operand.vmem [shape: f32[1,32], index: 4, kind: input, shape index: {}]
  %s5 = inlined_call_operand.hbm [shape: f32[2,64], index: 5, kind: output, shape index: {}]
  %s6 = sld [smem:[#allocation0]]
  $region50: #{tpu_custom_call.1} parent=0
    _
  %s8 = ssub.s32 1, %s6
  %s9 = scalar_select 0, %s8, %s6
  $region1: #{tpu_custom_call.1} parent=0
    #allocation6 [shape = 'u8[1024]{0}', space=vmem, size = 0x400, scoped, tag = 'input window, operand 0, single buffered']
    #allocation7 [shape = 's32[1]{0}', space=sflag, size = 0x4, scoped, tag = 'scoped memory for tpu_custom_call.1']
    #allocation8 [shape = 's32[1]{0}', space=sflag, size = 0x4, scoped, tag = 'scoped memory for tpu_custom_call.1']
    #allocation9 [shape = 'u8[16384]{0}', space=vmem, size = 0x4000, scoped, tag = 'input window, operand 1, single buffered']
    #allocation10 [shape = 's32[1]{0}', space=sflag, size = 0x4, scoped, tag = 'scoped memory for tpu_custom_call.1']
    #allocation11 [shape = 'u8[16384]{0}', space=vmem, size = 0x4000, scoped, tag = 'input window, operand 2, single buffered']
    #allocation12 [shape = 'u8[1024]{0}', space=vmem, size = 0x400, scoped, tag = 'output window, operand 0, single buffered']
    %10 = vsyncpa [#allocation7], 0
    %11 = vsyncpa [#allocation10], 0
    %12 = vsyncpa [#allocation8], 0
    // Predicated region
    $region2: #{tpu_custom_call.1} parent=1 // pred_check
      _
    $region3: #{tpu_custom_call.1} parent=1 // pred_check_branch
      %14 = sbr.rel (0) target = $region5
    $region4: #{tpu_custom_call.1} parent=1 // pred_region
      %s16 = ssub.s32 32, 32
      %17 = vsyncadd [#allocation7], %s16
      %s19 = sshll.u32 [#allocation6], 4
      %s20 = int_to_ptr.vmem [resolvable:$true] %s19
      %22 = dma.hbm_to_vmem [thread:$0]  %s0, 32, %s20, [#allocation7]
    $region5: #{tpu_custom_call.1} parent=1 // pred_fallthru
      _
    // Predicated region
    $region6: #{tpu_custom_call.1} parent=1 // pred_check
      _
    $region7: #{tpu_custom_call.1} parent=1 // pred_check_branch
      %24 = sbr.rel (0) target = $region9
    $region8: #{tpu_custom_call.1} parent=1 // pred_region
      %s26 = ssub.s32 512, 512
      %27 = vsyncadd [#allocation10], %s26
      %s28 = sshll.u32 [#allocation9], 4
      %s29 = int_to_ptr.vmem [resolvable:$true] %s28
      %34 = dma.hbm_to_vmem [thread:$0]  %s1, 512, %s29, [#allocation10], 128, 128, 8
    $region9: #{tpu_custom_call.1} parent=1 // pred_fallthru
      _
    // Predicated region
    $region10: #{tpu_custom_call.1} parent=1 // pred_check
      _
    $region11: #{tpu_custom_call.1} parent=1 // pred_check_branch
      %36 = sbr.rel (0) target = $region13
    $region12: #{tpu_custom_call.1} parent=1 // pred_region
      %s38 = ssub.s32 512, 512
      %39 = vsyncadd [#allocation10], %s38
      %s40 = sshll.u32 [#allocation11], 4
      %s41 = int_to_ptr.vmem [resolvable:$true] %s40
      %46 = dma.hbm_to_vmem [thread:$0]  %s2, 512, %s41, [#allocation10], 128, 128, 8
    $region13: #{tpu_custom_call.1} parent=1 // pred_fallthru
      _
    // Predicated region
    $region14: #{tpu_custom_call.1} parent=1 // pred_check
      _
    $region15: #{tpu_custom_call.1} parent=1 // pred_check_branch
      %48 = sbr.rel (0) target = $region17
    $region16: #{tpu_custom_call.1} parent=1 // pred_region
      _
    $region17: #{tpu_custom_call.1} parent=1 // pred_fallthru
      _
    // Predicated region
    $region18: #{tpu_custom_call.1} parent=1 // pred_check
      _
    $region19: #{tpu_custom_call.1} parent=1 // pred_check_branch
      %50 = sbr.rel (0) target = $region21
    $region20: #{tpu_custom_call.1} parent=1 // pred_region
      _
    $region21: #{tpu_custom_call.1} parent=1 // pred_fallthru
      _
    // Predicated region
    $region22: #{tpu_custom_call.1} parent=1 // pred_check
      _
    $region23: #{tpu_custom_call.1} parent=1 // pred_check_branch
      %52 = sbr.rel (0) target = $region25
    $region24: #{tpu_custom_call.1} parent=1 // pred_region
      %53 = dma.done [#allocation7], 32
    $region25: #{tpu_custom_call.1} parent=1 // pred_fallthru
      _
    // Predicated region
    $region26: #{tpu_custom_call.1} parent=1 // pred_check
      _
    $region27: #{tpu_custom_call.1} parent=1 // pred_check_branch
      %55 = sbr.rel (0) target = $region29
    $region28: #{tpu_custom_call.1} parent=1 // pred_region
      %56 = dma.done [#allocation10], 512
    $region29: #{tpu_custom_call.1} parent=1 // pred_fallthru
      _
    // Predicated region
    $region30: #{tpu_custom_call.1} parent=1 // pred_check
      _
    $region31: #{tpu_custom_call.1} parent=1 // pred_check_branch
      %58 = sbr.rel (0) target = $region33
    $region32: #{tpu_custom_call.1} parent=1 // pred_region
      %59 = dma.done [#allocation10], 512
    $region33: #{tpu_custom_call.1} parent=1 // pred_fallthru
      _
    %p60 = scmp.eq.s32.totalorder 0, 0
    // Predicated region
    $region34: #{tpu_custom_call.1} parent=1 // pred_check
      %p61 = pneg %p60
    $region35: #{tpu_custom_call.1} parent=1 // pred_check_branch
      %63 = sbr.rel (%p61) target = $region37
    $region36: #{tpu_custom_call.1} parent=1 // pred_region
      %vm64 = vcmask 1024
      %65 = vst.msk [vmem:[#allocation2] sm:$0x3] %vm64, -inf
      %66 = vst.msk [vmem:[#allocation3] sm:$0x3] %vm64, 0.0
      %vm67 = vcmask 254976
      %68 = vst.msk [vmem:[#allocation4] sm:$0x3] %vm67, 0.0
      %69 = vst.msk [vmem:[#allocation5] sm:$0x3] %vm67, 0.0
    $region37: #{tpu_custom_call.1} parent=1 // pred_fallthru
      _
    %v70 = vld [vmem:[#allocation9] sm:$0xff]
    %v71 = vld [vmem:[#allocation9 + $0x8] sm:$0xff]
    %v72 = vld [vmem:[#allocation9 + $0x10] sm:$0xff]
    %v73 = vld [vmem:[#allocation9 + $0x18] sm:$0xff]
    %v74 = vld [vmem:[#allocation6] sm:$0x3]
    %vm75 = vcmp.gt.f32.partialorder %v74, 0.0
    %v76 = vld [vmem:[#allocation11] sm:$0xff]
    %v77 = vld [vmem:[#allocation11 + $0x8] sm:$0xff]
    %v78 = vld [vmem:[#allocation11 + $0x10] sm:$0xff]
    %v79 = vld [vmem:[#allocation11 + $0x18] sm:$0xff]
    %v80 = vld [vmem:[%s3] sm:$0x1]
    %v82 = vlaneseq
    %v83 = vshrl.u32 %v82, 7
    %v84 = vsub.s32 0, %v83
    %v85 = vrot.slane %v80, %v84
    %vm87 = vcmask 261120
    %v89 = vsel %vm87, %v70, 0
    %v92 = vsel %vm87, %v71, 0
    %v95 = vsel %vm87, %v72, 0
    %v98 = vsel %vm87, %v73, 0
    %100 = vmatprep.subr.mxu0 0.0
    %101 = vmatpush1.msra.mxu0 %v76
    %102 = vmatprep.subr.mxu0 0.0
    %103 = vmatpush1.msra.mxu0 %v77
    %104 = vmatprep.subr.mxu0 0.0
    %105 = vmatpush1.msra.mxu0 %v78
    %106 = vmatprep.subr.mxu0 0.0
    %107 = vmatpush1.msra.mxu0 %v79
    %108 = vmatprep.subr.mxu0 0.0
    %109 = vmatpush1.msra.mxu0 0.0
    %110 = vmatprep.subr.mxu0 0.0
    %111 = vmatpush1.msra.mxu0 0.0
    %112 = vmatprep.subr.mxu0 0.0
    %113 = vmatpush1.msra.mxu0 0.0
    %114 = vmatprep.subr.mxu0 0.0
    %115 = vmatpush1.msra.mxu0 0.0
    %116 = vmatprep.subr.mxu0 0.0
    %117 = vmatpush1.msra.mxu0 0.0
    %118 = vmatprep.subr.mxu0 0.0
    %119 = vmatpush1.msra.mxu0 0.0
    %120 = vmatprep.subr.mxu0 0.0
    %121 = vmatpush1.msra.mxu0 0.0
    %122 = vmatprep.subr.mxu0 0.0
    %123 = vmatpush1.msra.mxu0 0.0
    %124 = vmatprep.subr.mxu0 0.0
    %125 = vmatpush1.msra.mxu0 0.0
    %126 = vmatprep.subr.mxu0 0.0
    %127 = vmatpush1.msra.mxu0 0.0
    %128 = vmatprep.subr.mxu0 0.0
    %129 = vmatpush1.msra.mxu0 0.0
    %130 = vmatprep.subr.mxu0 0.0
    %131 = vmatpush1.msra.mxu0 0.0
    %132 = vmatprep.subr.mxu0 0.0
    %133 = vmatpush1.msra.mxu0 0.0
    %134 = vmatprep.subr.mxu0 0.0
    %135 = vmatpush1.msra.mxu0 0.0
    %136 = vmatprep.subr.mxu0 0.0
    %137 = vmatpush1.msra.mxu0 0.0
    %138 = vmatprep.subr.mxu0 0.0
    %139 = vmatpush1.msra.mxu0 0.0
    %140 = vmatprep.subr.mxu0 0.0
    %141 = vmatpush1.msra.mxu0 0.0
    %142 = vmatprep.subr.mxu0 0.0
    %143 = vmatpush1.msra.mxu0 0.0
    %144 = vmatprep.subr.mxu0 0.0
    %145 = vmatpush1.msra.mxu0 0.0
    %146 = vmatprep.subr.mxu0 0.0
    %147 = vmatpush1.msra.mxu0 0.0
    %148 = vmatprep.subr.mxu0 0.0
    %149 = vmatpush1.msra.mxu0 0.0
    %150 = vmatprep.subr.mxu0 0.0
    %151 = vmatpush1.msra.mxu0 0.0
    %152 = vmatprep.subr.mxu0 0.0
    %153 = vmatpush1.msra.mxu0 0.0
    %154 = vmatprep.subr.mxu0 0.0
    %155 = vmatpush1.msra.mxu0 0.0
    %156 = vmatprep.subr.mxu0 0.0
    %157 = vmatpush1.msra.mxu0 0.0
    %158 = vmatprep.subr.mxu0 0.0
    %159 = vmatpush1.msra.mxu0 0.0
    %160 = vmatprep.subr.mxu0 0.0
    %161 = vmatpush1.msra.mxu0 0.0
    %162 = vmatprep.subr.mxu0 0.0
    %163 = vmatpush1.msra.mxu0 0.0
    %164 = vmatprep.mubr.f32.mxu0 0.0
    %165 = vmatmul.mubr.f32.gmra.mrb[0].mxu0 %v89
    %v166 = vpop.f32.mrb[0].mxu0
    %v167 = vadd.f32 %v85, %v166
    %v168 = vpop.f32.mrb[0].mxu0
    %169 = vmatprep.mubr.f32.mxu0 0.0
    %170 = vmatmul.mubr.f32.gmra.mrb[0].mxu0 %v92
    %v171 = vpop.f32.mrb[0].mxu0
    %v172 = vadd.f32 %v85, %v171
    %v173 = vpop.f32.mrb[0].mxu0
    %174 = vmatprep.mubr.f32.mxu0 0.0
    %175 = vmatmul.mubr.f32.gmra.mrb[0].mxu0 %v95
    %v176 = vpop.f32.mrb[0].mxu0
    %v177 = vadd.f32 %v85, %v176
    %v178 = vpop.f32.mrb[0].mxu0
    %179 = vmatprep.mubr.f32.mxu0 0.0
    %180 = vmatmul.mubr.f32.gmra.mrb[0].mxu0 %v98
    %v181 = vpop.f32.mrb[0].mxu0
    %v182 = vadd.f32 %v85, %v181
    %v183 = vpop.f32.mrb[0].mxu0
    %184 = vdwg.mxu0
    %v185 = vtanh.pop %v167
    %v186 = vtanh.pop %v172
    %v187 = vtanh.pop %v177
    %v188 = vtanh.pop %v182
    %v189 = vld [vmem:[%s4] sm:$0x1]
    %v191 = vlaneseq
    %v192 = vshrl.u32 %v191, 7
    %v193 = vsub.s32 0, %v192
    %v194 = vrot.slane %v189, %v193
    %v196 = vmul.f32 %v185, %v194
    %v197 = vmul.f32 %v186, %v194
    %v198 = vmul.f32 %v187, %v194
    %v199 = vmul.f32 %v188, %v194
    %v200 = vsel %vm87, %v196, 0.0
    %201 = vadd.xlane.f32.xlu0 %v200
    %v202 = vpop.xlane.xlu0 %201
    %v203 = vsel %vm87, %v197, 0.0
    %204 = vadd.xlane.f32.xlu0 %v203
    %v205 = vpop.xlane.xlu0 %204
    %v206 = vsel %vm87, %v198, 0.0
    %207 = vadd.xlane.f32.xlu0 %v206
    %v208 = vpop.xlane.xlu0 %207
    %v209 = vsel %vm87, %v199, 0.0
    %210 = vadd.xlane.f32.xlu0 %v209
    %v211 = vpop.xlane.xlu0 %210
    %v216 = vlaneseq
    %v217 = vand.u32 %v216, 127
    %v218 = vlaneseq
    %v219 = vshrl.u32 %v218, 7
    %v220 = vsub.s32 %v217, %v219
    %v221 = vrot.slane %v202, %v220
    %v222 = vadd.s32 %v217, 4294967288
    %v223 = vlaneseq
    %v224 = vshrl.u32 %v223, 7
    %v225 = vsub.s32 %v222, %v224
    %v226 = vrot.slane %v205, %v225
    %vm227 = vcmask 130112
    %v228 = vsel %vm227, %v226, %v221
    %v229 = vlaneseq
    %v230 = vshrl.u32 %v229, 7
    %v231 = vsub.s32 %v217, %v230
    %v232 = vrot.slane %v208, %v231
    %v233 = vlaneseq
    %v234 = vshrl.u32 %v233, 7
    %v235 = vsub.s32 %v222, %v234
    %v236 = vrot.slane %v211, %v235
    %v237 = vsel %vm227, %v236, %v232
    %vm238 = vcmask 1041409
    %v239 = vsel %vm238, %v237, %v228
    %v241 = vsel %vm75, %v239, -1e+30
    %v242 = vld [vmem:[#allocation2] sm:$0x3]
    %vm243 = vcmask 123904
    %v244 = vsel %vm243, %v241, -inf
    %245 = vmax.xlane.f32.xlu0 %v244
    %v246 = vpop.xlane.xlu0 %245
    %v247 = vmax.f32 %v242, %v246
    %v248 = vsub.f32 %v242, %v247
    %v249 = vmul.f32 %v248, 1.442695
    %v250 = vpow.pop %v249
    %252 = vset.pattern.permute.xlu0 0
    %253 = vperm.xlu0 %252, %v247
    %v254 = vpop.permute.xlu0 %253
    %v256 = vsub.f32 %v241, %v254
    %v257 = vmul.f32 %v256, 1.442695
    %v258 = vpow.pop %v257
    %v259 = vsel %vm75, %v258, 0.0
    %v260 = vld [vmem:[#allocation3] sm:$0x3]
    %v261 = vmul.f32 %v250, %v260
    %v262 = vsel %vm243, %v259, 0.0
    %263 = vadd.xlane.f32.xlu0 %v262
    %v264 = vpop.xlane.xlu0 %263
    %v265 = vadd.f32 %v261, %v264
    %vm266 = vcmask 1024
    %267 = vst.msk [vmem:[#allocation3] sm:$0x3] %vm266, %v265
    %v268 = vlaneseq
    %v269 = vshrl.u32 %v268, 7
    %v270 = vsub.s32 0, %v269
    %v271 = vrot.slane %v259, %v270
    %273 = vbcast.lane.b32.xlu0 %v271, 256
    %v274 = vpop.permute.xlu0 %273
    %s276 = sor.u32 256, 8
    %277 = vbcast.lane.b32.xlu0 %v271, %s276
    %v278 = vpop.permute.xlu0 %277
    %v279 = vlaneseq
    %v280 = vshrl.u32 %v279, 7
    %v281 = vsub.s32 1, %v280
    %v282 = vrot.slane %v259, %v281
    %284 = vbcast.lane.b32.xlu0 %v282, 256
    %v285 = vpop.permute.xlu0 %284
    %s287 = sor.u32 256, 8
    %288 = vbcast.lane.b32.xlu0 %v282, %s287
    %v289 = vpop.permute.xlu0 %288
    %v290 = vmul.f32 %v274, %v70
    %v291 = vmul.f32 %v278, %v71
    %v292 = vmul.f32 %v285, %v72
    %v293 = vmul.f32 %v289, %v73
    %v294 = vld [vmem:[#allocation4] sm:$0x3]
    %296 = vset.pattern.permute.xlu0 0
    %297 = vperm.xlu0 %296, %v250
    %v298 = vpop.permute.xlu0 %297
    %v300 = vmul.f32 %v298, %v294
    %v301 = vsel %vm87, %v290, 0.0
    %v302 = vsel %vm87, %v291, 0.0
    %v303 = vadd.f32 %v301, %v302
    %v304 = vrot.slane %v303, 4
    %v305 = vadd.f32 %v303, %v304
    %v306 = vrot.slane %v305, 2
    %v307 = vadd.f32 %v305, %v306
    %v308 = vrot.slane %v307, 1
    %v309 = vadd.f32 %v307, %v308
    %v310 = vsel %vm87, %v292, 0.0
    %v311 = vsel %vm87, %v293, 0.0
    %v312 = vadd.f32 %v310, %v311
    %v313 = vrot.slane %v312, 4
    %v314 = vadd.f32 %v312, %v313
    %v315 = vrot.slane %v314, 2
    %v316 = vadd.f32 %v314, %v315
    %v317 = vrot.slane %v316, 1
    %v318 = vadd.f32 %v316, %v317
    %v321 = vsel %vm238, %v318, %v309
    %v323 = vadd.f32 %v300, %v321
    %vm324 = vcmask 254976
    %325 = vst.msk [vmem:[#allocation4] sm:$0x3] %vm324, %v323
    %v326 = vld [vmem:[#allocation5] sm:$0x3]
    %v327 = vmul.f32 %v298, %v326
    %v328 = vmul.f32 %v290, %v70
    %v329 = vmul.f32 %v291, %v71
    %v330 = vmul.f32 %v292, %v72
    %v331 = vmul.f32 %v293, %v73
    %v332 = vsel %vm87, %v328, 0.0
    %v333 = vsel %vm87, %v329, 0.0
    %v334 = vadd.f32 %v332, %v333
    %v335 = vrot.slane %v334, 4
    %v336 = vadd.f32 %v334, %v335
    %v337 = vrot.slane %v336, 2
    %v338 = vadd.f32 %v336, %v337
    %v339 = vrot.slane %v338, 1
    %v340 = vadd.f32 %v338, %v339
    %v341 = vsel %vm87, %v330, 0.0
    %v342 = vsel %vm87, %v331, 0.0
    %v343 = vadd.f32 %v341, %v342
    %v344 = vrot.slane %v343, 4
    %v345 = vadd.f32 %v343, %v344
    %v346 = vrot.slane %v345, 2
    %v347 = vadd.f32 %v345, %v346
    %v348 = vrot.slane %v347, 1
    %v349 = vadd.f32 %v347, %v348
    %v352 = vsel %vm238, %v349, %v340
    %v354 = vadd.f32 %v327, %v352
    %355 = vst.msk [vmem:[#allocation5] sm:$0x3] %vm324, %v354
    %356 = vst.msk [vmem:[#allocation2] sm:$0x3] %vm266, %v247
    // Predicated region
    $region38: #{tpu_custom_call.1} parent=1 // pred_check
      %p357 = pneg %p60
    $region39: #{tpu_custom_call.1} parent=1 // pred_check_branch
      %359 = sbr.rel (%p357) target = $region41
    $region40: #{tpu_custom_call.1} parent=1 // pred_region
      %v360 = vld [vmem:[#allocation3] sm:$0x3]
      %v361 = vmax.f32 %v360, 1e-30
      %v362 = vld [vmem:[#allocation4] sm:$0x3]
      %364 = vset.pattern.permute.xlu0 0
      %365 = vperm.xlu0 %364, %v361
      %v366 = vpop.permute.xlu0 %365
      %v368 = vrcp.pop %v366
      %v369 = vmul.f32 %v362, %v368
      %v370 = vld [vmem:[#allocation5] sm:$0x3]
      %v371 = vmul.f32 %v370, %v368
      %372 = vst.msk [vmem:[#allocation12] sm:$0x3] %vm324, %v369
      %v373 = vmul.f32 %v369, %v369
      %v374 = vsub.f32 %v371, %v373
      %v375 = vmax.f32 %v374, 1e-05
      %v376 = vrsqrt.pop %v375
      %v377 = vmul.f32 %v375, %v376
      %vm378 = vcmp.eq.f32.partialorder %v375, inf
      %v379 = vsel %vm378, %v375, %v377
      %vm380 = vcmp.eq.f32.partialorder %v375, 0.0
      %v381 = vand.u32 %v375, 2147483648
      %v382 = vsel %vm380, %v381, %v379
      %384 = vrot.lane.b32.xlu0 %v382, 32
      %v385 = vpop.permute.xlu0 %384
      %vm387 = vcmask 517376
      %388 = vst.msk [vmem:[#allocation12] sm:$0x3] %vm387, %v385
    $region41: #{tpu_custom_call.1} parent=1 // pred_fallthru
      _
    // Predicated region
    $region42: #{tpu_custom_call.1} parent=1 // pred_check
      _
    $region43: #{tpu_custom_call.1} parent=1 // pred_check_branch
      %390 = sbr.rel (0) target = $region45
    $region44: #{tpu_custom_call.1} parent=1 // pred_region
      %s392 = ssub.s32 32, 32
      %393 = vsyncadd [#allocation8], %s392
      %s395 = sshll.u32 [#allocation12], 4
      %s396 = int_to_ptr.vmem [resolvable:$true] %s395
      %398 = dma.vmem_to_hbm [thread:$0]  %s396, 32, %s5, [#allocation8]
    $region45: #{tpu_custom_call.1} parent=1 // pred_fallthru
      _
    // Predicated region
    $region46: #{tpu_custom_call.1} parent=1 // pred_check
      _
    $region47: #{tpu_custom_call.1} parent=1 // pred_check_branch
      %400 = sbr.rel (0) target = $region49
    $region48: #{tpu_custom_call.1} parent=1 // pred_region
      %401 = dma.done [#allocation8], 32
    $region49: #{tpu_custom_call.1} parent=1 // pred_fallthru
      _
    %402 = vsyncpa [#allocation7], 1
    %403 = vsyncpa [#allocation10], 1
    %404 = vsyncpa [#allocation8], 1

</llo_original>
